<compile_context>
chip_gen: v5e
topology: v5e:2x2
jax: 0.10.0
libtpu: 0.0.40
codegen_flags: <defaults>
</compile_context>

<pallas_src>
import jax
import jax.numpy as jnp
from jax.experimental import pallas as pl
from jax.experimental.pallas import tpu as pltpu


# ----------------------------------------------------------------------------
# Kernel
# ----------------------------------------------------------------------------
def _mlp_kernel(x_ref, w_ref, b_ref, o_ref):
    # x_ref: [tm, D] bf16, w_ref: [3, D, D] bf16, b_ref: [3, 1, D] f32
    x = x_ref[...]
    h1 = jnp.dot(x, w_ref[0], preferred_element_type=jnp.float32) + b_ref[0]
    h1 = jnp.maximum(h1, 0.0).astype(jnp.bfloat16)                      # ReLU
    h2 = jnp.dot(h1, w_ref[1], preferred_element_type=jnp.float32) + b_ref[1]
    h2 = jnp.maximum(h2, 0.0).astype(jnp.bfloat16)                      # ReLU
    out = jnp.dot(h2, w_ref[2], preferred_element_type=jnp.float32) + b_ref[2]
    o_ref[...] = out.astype(o_ref.dtype)


# ----------------------------------------------------------------------------
# Helpers
# ----------------------------------------------------------------------------
def _round_up(n, m):
    return ((n + m - 1) // m) * m


def _pad_to(a, shape):
    return jnp.pad(a, [(0, s - d) for d, s in zip(a.shape, shape)])


def _is_v7x():
    try:
        kind = jax.devices()[0].device_kind.lower()
    except Exception:
        return False
    return "v7" in kind or "7x" in kind


_TM_CAP = 512  # keep per-step VMEM modest even on v7x (32 MiB scoped default)


def _choose_tiling(B):
    """Returns (B_pad, tm, num_tiles, dimension_semantics)."""
    B8 = _round_up(B, 8)
    if B8 <= _TM_CAP:
        # Single fat step: minimal per-step overhead, weights DMA'd once.
        return B8, B8, 1, ("arbitrary",)
    # Large batch: cap tm, grow grid.  Only shard across the 2 v7x TensorCores
    # when each core gets a decently sized tile (>= 256 rows).
    num_tiles = pl.cdiv(B8, _TM_CAP)
    B_pad = _round_up(B, 8 * num_tiles)
    tm = B_pad // num_tiles
    if _is_v7x() and num_tiles >= 2 and tm >= 256:
        sem = (pltpu.CORE_PARALLEL,)
    else:
        sem = ("arbitrary",)
    return B_pad, tm, num_tiles, sem


# ----------------------------------------------------------------------------
# One-time parameter packing (hoisted out of the per-call path)
# ----------------------------------------------------------------------------
def prepare_params(params):
    """Pack raw f32 params (w as [in,out], b as [1,out]) into kernel layout.

    Call once at init; the result can be reused for every forward.
    """
    w1, b1 = params["w1"], params["b1"]   # [F, H1], [1, H1]
    w2, b2 = params["w2"], params["b2"]   # [H1, H2], [1, H2]
    w3, b3 = params["w3"], params["b3"]   # [H2, C], [1, C]
    F, H1 = w1.shape
    H2, C = w2.shape[1], w3.shape[1]

    # Common lane-dense width: everything padded to a multiple of 128.
    D = _round_up(max(F, H1, H2, C), 128)

    # Zero padding is load-bearing: padded W columns and padded bias lanes are
    # zero, so padded activations stay exactly zero through ReLU and the final
    # [:B, :C] slice is exact.
    W = jnp.stack([_pad_to(w1, (D, D)),
                   _pad_to(w2, (D, D)),
                   _pad_to(w3, (D, D))]).astype(jnp.bfloat16)               # [3, D, D]
    Bv = jnp.stack([_pad_to(b1.reshape(1, -1), (1, D)),
                    _pad_to(b2.reshape(1, -1), (1, D)),
                    _pad_to(b3.reshape(1, -1), (1, D))]).astype(jnp.float32)  # [3, 1, D]

    W = jax.block_until_ready(W)
    Bv = jax.block_until_ready(Bv)
    return {"W": W, "B": Bv, "dims": (F, H1, H2, C, D)}


# ----------------------------------------------------------------------------
# Forward
# ----------------------------------------------------------------------------
def deep_nn_0_forward(x, packed):
    """x: [B, n_features] float32. packed: output of prepare_params()."""
    B, F_in = x.shape
    F, H1, H2, C, D = packed["dims"]
    assert F_in == F, f"feature dim mismatch: {F_in} vs {F}"
    W, Bv = packed["W"], packed["B"]

    B_pad, tm, num_tiles, dim_sem = _choose_tiling(B)

    # Per-call layout plumbing: only x is padded + cast.
    x_p = _pad_to(x, (B_pad, D)).astype(jnp.bfloat16)                       # [B_pad, D]

    # Real (unpadded) cost — this call is tiny; tell XLA so.
    real_weight_elems = F * H1 + H1 * H2 + H2 * C
    flops = 2 * B * real_weight_elems
    bytes_accessed = (B * F * 4                       # x
                      + real_weight_elems * 4         # weights
                      + (H1 + H2 + C) * 4             # biases
                      + B * C * 4)                    # logits

    # Weights/biases are grid-invariant: single-buffer them when the grid has
    # more than one step (no point double-buffering a resident operand).
    if num_tiles > 1:
        const_kwargs = dict(pipeline_mode=pl.Buffered(1))
    else:
        const_kwargs = {}

    in_specs = [
        pl.BlockSpec((tm, D), lambda i: (i, 0)),                     # x batch tile
        pl.BlockSpec((3, D, D), lambda i: (0, 0, 0), **const_kwargs),  # stacked weights
        pl.BlockSpec((3, 1, D), lambda i: (0, 0, 0), **const_kwargs),  # stacked biases
    ]

    out = pl.pallas_call(
        _mlp_kernel,
        out_shape=jax.ShapeDtypeStruct((B_pad, D), jnp.float32),
        grid_spec=pltpu.PrefetchScalarGridSpec(
            num_scalar_prefetch=0,
            grid=(num_tiles,),
            in_specs=in_specs,
            out_specs=pl.BlockSpec((tm, D), lambda i: (i, 0)),
        ),
        compiler_params=pltpu.CompilerParams(
            dimension_semantics=dim_sem,
        ),
        cost_estimate=pl.CostEstimate(
            flops=flops, transcendentals=0, bytes_accessed=bytes_accessed),
    )(x_p, W, Bv)

    # Strip batch and class padding (padded lanes are exactly zero by construction).
    return out[:B, :C]


# ----------------------------------------------------------------------------
# Init + reference (for the self-test)
# ----------------------------------------------------------------------------
def init_params(key, n_features, n_hidden1, n_hidden2, n_classes):
    """Deterministic init mimicking nn.Linear's U(-1/sqrt(fan_in), 1/sqrt(fan_in))."""
    ks = jax.random.split(key, 6)

    def linear(kw, kb, fan_in, fan_out):
        bound = 1.0 / jnp.sqrt(jnp.float32(fan_in))
        w = jax.random.uniform(kw, (fan_in, fan_out), jnp.float32, -bound, bound)
        b = jax.random.uniform(kb, (1, fan_out), jnp.float32, -bound, bound)
        return w, b

    w1, b1 = linear(ks[0], ks[1], n_features, n_hidden1)
    w2, b2 = linear(ks[2], ks[3], n_hidden1, n_hidden2)
    w3, b3 = linear(ks[4], ks[5], n_hidden2, n_classes)
    return {"w1": w1, "b1": b1, "w2": w2, "b2": b2, "w3": w3, "b3": b3}


def reference_forward(x, p):
    h1 = jnp.maximum(x @ p["w1"] + p["b1"], 0.0)
    h2 = jnp.maximum(h1 @ p["w2"] + p["b2"], 0.0)
    return h2 @ p["w3"] + p["b3"]


# TODO(synk): file reading, tokenization, GloVe embedding lookup and the
# training loop of `neural_network_sentiment.fit` are host-side data plumbing
# with no Pallas equivalent; only the forward pass is implemented as a kernel.

if __name__ == "__main__":
    # Shapes implied by the module: n_features=50 (GloVe-style mean embeddings),
    # two hidden layers of 32, n_classes=2 (binary sentiment), batch_size=64.
    n_features, n_hidden1, n_hidden2, n_classes = 50, 32, 32, 2
    batch = 64

    key = jax.random.PRNGKey(0)
    k_x, k_p = jax.random.split(key)
    x = jax.random.normal(k_x, (batch, n_features), jnp.float32)
    params = init_params(k_p, n_features, n_hidden1, n_hidden2, n_classes)

    # One-time packing (hoisted out of the per-call path).
    packed = prepare_params(params)

    out = jax.block_until_ready(deep_nn_0_forward(x, packed))

    ref = reference_forward(x, params)
    assert out.shape == (batch, n_classes)
    # bf16 matmul operands (f32 accumulation) -> loosen tolerance vs f32 reference.
    assert jnp.allclose(out, ref, atol=3e-2, rtol=3e-2), "mismatch vs reference"

    print("KERNEL_OK")
</pallas_src>

<mosaic_0001>
module attributes {stable_mosaic.version = 11 : i64} {
  func.func @_mlp_kernel(%arg0: i32, %arg1: memref<64x128xbf16, #tpu.memory_space<vmem>>, %arg2: memref<3x128x128xbf16, #tpu.memory_space<vmem>>, %arg3: memref<3x1x128xf32, #tpu.memory_space<vmem>>, %arg4: memref<64x128xf32, #tpu.memory_space<vmem>>) attributes {dimension_semantics = [#tpu.dimension_semantics<arbitrary>], iteration_bounds = array<i64: 1>, scalar_prefetch = 0 : i64, scratch_operands = 0 : i64, tpu.core_type = #tpu.core_type<tc>, window_params = [{transform_indices = @transform_0, window_bounds = array<i64: 64, 128>}, {pipeline_mode = #tpu.pipeline_mode<synchronous>, transform_indices = @transform_1, window_bounds = array<i64: 3, 128, 128>}, {pipeline_mode = #tpu.pipeline_mode<synchronous>, transform_indices = @transform_2, window_bounds = array<i64: 3, 1, 128>}, {transform_indices = @transform_3, window_bounds = array<i64: 64, 128>}]} {
    %c0 = arith.constant 0 : index
    %c0_0 = arith.constant 0 : index
    %0 = vector.load %arg1[%c0, %c0_0] : memref<64x128xbf16, #tpu.memory_space<vmem>>, vector<64x128xbf16>
    %c0_1 = arith.constant 0 : index
    %c0_2 = arith.constant 0 : index
    %c0_3 = arith.constant 0 : index
    %1 = vector.load %arg2[%c0_1, %c0_2, %c0_3] : memref<3x128x128xbf16, #tpu.memory_space<vmem>>, vector<1x128x128xbf16>
    %2 = vector.shape_cast %1 : vector<1x128x128xbf16> to vector<128x128xbf16>
    %cst = arith.constant dense<0.000000e+00> : vector<64x128xf32>
    %3 = tpu.matmul %0, %2, %cst {dimension_numbers = #tpu.dot_dimension_numbers<[1], [0], [0], [1], [0, 0, 1, 1], [], []>} : vector<64x128xbf16>, vector<128x128xbf16>, vector<64x128xf32> -> vector<64x128xf32>
    %c0_4 = arith.constant 0 : index
    %c0_5 = arith.constant 0 : index
    %c0_6 = arith.constant 0 : index
    %4 = vector.load %arg3[%c0_4, %c0_5, %c0_6] : memref<3x1x128xf32, #tpu.memory_space<vmem>>, vector<1x1x128xf32>
    %5 = vector.shape_cast %4 : vector<1x1x128xf32> to vector<1x128xf32>
    %6 = vector.broadcast %5 : vector<1x128xf32> to vector<64x128xf32>
    %7 = arith.addf %3, %6 : vector<64x128xf32>
    %cst_7 = arith.constant 0.000000e+00 : f32
    %8 = vector.broadcast %cst_7 : f32 to vector<64x128xf32>
    %9 = arith.maximumf %7, %8 : vector<64x128xf32>
    %10 = arith.truncf %9 : vector<64x128xf32> to vector<64x128xbf16>
    %c1 = arith.constant 1 : index
    %c0_8 = arith.constant 0 : index
    %c0_9 = arith.constant 0 : index
    %11 = vector.load %arg2[%c1, %c0_8, %c0_9] : memref<3x128x128xbf16, #tpu.memory_space<vmem>>, vector<1x128x128xbf16>
    %12 = vector.shape_cast %11 : vector<1x128x128xbf16> to vector<128x128xbf16>
    %cst_10 = arith.constant dense<0.000000e+00> : vector<64x128xf32>
    %13 = tpu.matmul %10, %12, %cst_10 {dimension_numbers = #tpu.dot_dimension_numbers<[1], [0], [0], [1], [0, 0, 1, 1], [], []>} : vector<64x128xbf16>, vector<128x128xbf16>, vector<64x128xf32> -> vector<64x128xf32>
    %c1_11 = arith.constant 1 : index
    %c0_12 = arith.constant 0 : index
    %c0_13 = arith.constant 0 : index
    %14 = vector.load %arg3[%c1_11, %c0_12, %c0_13] : memref<3x1x128xf32, #tpu.memory_space<vmem>>, vector<1x1x128xf32>
    %15 = vector.shape_cast %14 : vector<1x1x128xf32> to vector<1x128xf32>
    %16 = vector.broadcast %15 : vector<1x128xf32> to vector<64x128xf32>
    %17 = arith.addf %13, %16 : vector<64x128xf32>
    %cst_14 = arith.constant 0.000000e+00 : f32
    %18 = vector.broadcast %cst_14 : f32 to vector<64x128xf32>
    %19 = arith.maximumf %17, %18 : vector<64x128xf32>
    %20 = arith.truncf %19 : vector<64x128xf32> to vector<64x128xbf16>
    %c2 = arith.constant 2 : index
    %c0_15 = arith.constant 0 : index
    %c0_16 = arith.constant 0 : index
    %21 = vector.load %arg2[%c2, %c0_15, %c0_16] : memref<3x128x128xbf16, #tpu.memory_space<vmem>>, vector<1x128x128xbf16>
    %22 = vector.shape_cast %21 : vector<1x128x128xbf16> to vector<128x128xbf16>
    %cst_17 = arith.constant dense<0.000000e+00> : vector<64x128xf32>
    %23 = tpu.matmul %20, %22, %cst_17 {dimension_numbers = #tpu.dot_dimension_numbers<[1], [0], [0], [1], [0, 0, 1, 1], [], []>} : vector<64x128xbf16>, vector<128x128xbf16>, vector<64x128xf32> -> vector<64x128xf32>
    %c2_18 = arith.constant 2 : index
    %c0_19 = arith.constant 0 : index
    %c0_20 = arith.constant 0 : index
    %24 = vector.load %arg3[%c2_18, %c0_19, %c0_20] : memref<3x1x128xf32, #tpu.memory_space<vmem>>, vector<1x1x128xf32>
    %25 = vector.shape_cast %24 : vector<1x1x128xf32> to vector<1x128xf32>
    %26 = vector.broadcast %25 : vector<1x128xf32> to vector<64x128xf32>
    %27 = arith.addf %23, %26 : vector<64x128xf32>
    %c0_21 = arith.constant 0 : index
    %c0_22 = arith.constant 0 : index
    %28 = vector.load %arg4[%c0_21, %c0_22] : memref<64x128xf32, #tpu.memory_space<vmem>>, vector<64x128xf32>
    tpu.vector_store %arg4[%c0_21, %c0_22], %27 {strides = array<i32>} : memref<64x128xf32, #tpu.memory_space<vmem>>, vector<64x128xf32>,
    return
  }
  func.func @transform_0(%arg0: i32) -> (i32, i32) {
    %c0_i32 = arith.constant 0 : i32
    %c0_i32_0 = arith.constant 0 : i32
    return %arg0, %c0_i32 : i32, i32
  }
  func.func @transform_1(%arg0: i32) -> (i32, i32, i32) {
    %c0_i32 = arith.constant 0 : i32
    %c0_i32_0 = arith.constant 0 : i32
    %c0_i32_1 = arith.constant 0 : i32
    %c0_i32_2 = arith.constant 0 : i32
    return %c0_i32, %c0_i32_0, %c0_i32_1 : i32, i32, i32
  }
  func.func @transform_2(%arg0: i32) -> (i32, i32, i32) {
    %c0_i32 = arith.constant 0 : i32
    %c0_i32_0 = arith.constant 0 : i32
    %c0_i32_1 = arith.constant 0 : i32
    %c0_i32_2 = arith.constant 0 : i32
    return %c0_i32, %c0_i32_0, %c0_i32_1 : i32, i32, i32
  }
  func.func @transform_3(%arg0: i32) -> (i32, i32) {
    %c0_i32 = arith.constant 0 : i32
    %c0_i32_0 = arith.constant 0 : i32
    return %arg0, %c0_i32 : i32, i32
  }
}

</mosaic_0001>

<llo_original>
// kernel: tpu_custom_call.1
$region0: #{tpu_custom_call.1}
  #allocation0 [shape = 'u32[]', space=smem, size = 0x4, offset = 0x4, fixed_abs, tag = 'smem constant byte address 0x4 - core index']
  #allocation1 [shape = 'u32[72,128]{1,0:T(1,128)}', space=vmem, size = 0x9000, scoped, tag = 'internal scratch']
  %s0 = inlined_call_operand.hbm [shape: bf16[64,128], index: 0, kind: input, shape index: {}]
  %s1 = inlined_call_operand.hbm [shape: bf16[3,128,128], index: 1, kind: input, shape index: {}]
  %s2 = inlined_call_operand.hbm [shape: f32[3,1,128], index: 2, kind: input, shape index: {}]
  %s3 = inlined_call_operand.hbm [shape: f32[64,128], index: 3, kind: output, shape index: {}]
  %s4 = sld [smem:[#allocation0]]
  $region34: #{tpu_custom_call.1} parent=0
    _
  %s6 = ssub.s32 1, %s4
  %s7 = scalar_select 0, %s6, %s4
  $region1: #{tpu_custom_call.1} parent=0
    #allocation2 [shape = 'u8[16384]{0}', space=vmem, size = 0x4000, scoped, tag = 'input window, operand 0, single buffered']
    #allocation3 [shape = 's32[1]{0}', space=sflag, size = 0x4, scoped, tag = 'scoped memory for tpu_custom_call.1']
    #allocation4 [shape = 's32[1]{0}', space=sflag, size = 0x4, scoped, tag = 'scoped memory for tpu_custom_call.1']
    #allocation5 [shape = 'u8[98304]{0}', space=vmem, size = 0x18000, scoped, tag = 'input window, operand 1, single buffered']
    #allocation6 [shape = 's32[1]{0}', space=sflag, size = 0x4, scoped, tag = 'scoped memory for tpu_custom_call.1']
    #allocation7 [shape = 'u8[1536]{0}', space=vmem, size = 0x800, scoped, tag = 'input window, operand 2, single buffered']
    #allocation8 [shape = 'u8[32768]{0}', space=vmem, size = 0x8000, scoped, tag = 'output window, operand 0, single buffered']
    %8 = vsyncpa [#allocation3], 0
    %9 = vsyncpa [#allocation6], 0
    %10 = vsyncpa [#allocation4], 0
    // Predicated region
    $region2: #{tpu_custom_call.1} parent=1 // pred_check
      _
    $region3: #{tpu_custom_call.1} parent=1 // pred_check_branch
      %12 = sbr.rel (0) target = $region5
    $region4: #{tpu_custom_call.1} parent=1 // pred_region
      %14 = vsyncadd [#allocation3], 0
      %s15 = sshll.u32 %s0, 4
      %s16 = int_to_ptr.hbm [resolvable:$true] %s15
      %s17 = sshll.u32 [#allocation2], 4
      %s18 = int_to_ptr.vmem [resolvable:$true] %s17
      %23 = dma.hbm_to_vmem [thread:$0]  %s16, 512, %s18, [#allocation3], 64, 64, 4
    $region5: #{tpu_custom_call.1} parent=1 // pred_fallthru
      _
    // Predicated region
    $region6: #{tpu_custom_call.1} parent=1 // pred_check
      _
    $region7: #{tpu_custom_call.1} parent=1 // pred_check_branch
      %25 = sbr.rel (0) target = $region9
    $region8: #{tpu_custom_call.1} parent=1 // pred_region
      %27 = vsyncadd [#allocation6], 0
      %s28 = sshll.u32 %s1, 4
      %s29 = int_to_ptr.hbm [resolvable:$true] %s28
      %s30 = sshll.u32 [#allocation5], 4
      %s31 = int_to_ptr.vmem [resolvable:$true] %s30
      %36 = dma.hbm_to_vmem [thread:$0]  %s29, 3072, %s31, [#allocation6], 64, 64, 4
    $region9: #{tpu_custom_call.1} parent=1 // pred_fallthru
      _
    // Predicated region
    $region10: #{tpu_custom_call.1} parent=1 // pred_check
      _
    $region11: #{tpu_custom_call.1} parent=1 // pred_check_branch
      %38 = sbr.rel (0) target = $region13
    $region12: #{tpu_custom_call.1} parent=1 // pred_region
      %40 = vsyncadd [#allocation6], 0
      %s41 = sshll.u32 %s2, 4
      %s42 = int_to_ptr.hbm [resolvable:$true] %s41
      %s43 = sshll.u32 [#allocation7], 4
      %s44 = int_to_ptr.vmem [resolvable:$true] %s43
      %49 = dma.hbm_to_vmem [thread:$0]  %s42, 48, %s44, [#allocation6], 16, 16, 1
    $region13: #{tpu_custom_call.1} parent=1 // pred_fallthru
      _
    // Predicated region
    $region14: #{tpu_custom_call.1} parent=1 // pred_check
      _
    $region15: #{tpu_custom_call.1} parent=1 // pred_check_branch
      %51 = sbr.rel (0) target = $region17
    $region16: #{tpu_custom_call.1} parent=1 // pred_region
      %53 = dma.done [#allocation3], 512
    $region17: #{tpu_custom_call.1} parent=1 // pred_fallthru
      _
    // Predicated region
    $region18: #{tpu_custom_call.1} parent=1 // pred_check
      _
    $region19: #{tpu_custom_call.1} parent=1 // pred_check_branch
      %55 = sbr.rel (0) target = $region21
    $region20: #{tpu_custom_call.1} parent=1 // pred_region
      %57 = dma.done [#allocation6], 3072
    $region21: #{tpu_custom_call.1} parent=1 // pred_fallthru
      _
    // Predicated region
    $region22: #{tpu_custom_call.1} parent=1 // pred_check
      _
    $region23: #{tpu_custom_call.1} parent=1 // pred_check_branch
      %59 = sbr.rel (0) target = $region25
    $region24: #{tpu_custom_call.1} parent=1 // pred_region
      %61 = dma.done [#allocation6], 48
    $region25: #{tpu_custom_call.1} parent=1 // pred_fallthru
      _
    %v62 = vld [vmem:[#allocation2] sm:$0xf]
    %v63 = vld [vmem:[#allocation2 + $0x4] sm:$0xf]
    %v64 = vld [vmem:[#allocation2 + $0x8] sm:$0xf]
    %v65 = vld [vmem:[#allocation2 + $0xc] sm:$0xf]
    %v66 = vld [vmem:[#allocation2 + $0x10] sm:$0xf]
    %v67 = vld [vmem:[#allocation2 + $0x14] sm:$0xf]
    %v68 = vld [vmem:[#allocation2 + $0x18] sm:$0xf]
    %v69 = vld [vmem:[#allocation2 + $0x1c] sm:$0xf]
    %v70 = vld [vmem:[#allocation5] sm:$0xf]
    %v71 = vld [vmem:[#allocation5 + $0x4] sm:$0xf]
    %v72 = vld [vmem:[#allocation5 + $0x8] sm:$0xf]
    %v73 = vld [vmem:[#allocation5 + $0xc] sm:$0xf]
    %v74 = vld [vmem:[#allocation5 + $0x10] sm:$0xf]
    %v75 = vld [vmem:[#allocation5 + $0x14] sm:$0xf]
    %v76 = vld [vmem:[#allocation5 + $0x18] sm:$0xf]
    %v77 = vld [vmem:[#allocation5 + $0x1c] sm:$0xf]
    %v78 = vld [vmem:[#allocation5 + $0x20] sm:$0xf]
    %v79 = vld [vmem:[#allocation5 + $0x24] sm:$0xf]
    %v80 = vld [vmem:[#allocation5 + $0x28] sm:$0xf]
    %v81 = vld [vmem:[#allocation5 + $0x2c] sm:$0xf]
    %v82 = vld [vmem:[#allocation5 + $0x30] sm:$0xf]
    %v83 = vld [vmem:[#allocation5 + $0x34] sm:$0xf]
    %v84 = vld [vmem:[#allocation5 + $0x38] sm:$0xf]
    %v85 = vld [vmem:[#allocation5 + $0x3c] sm:$0xf]
    %v86 = vld [vmem:[#allocation7] sm:$0x1]
    %v88 = vperm.slane %v86, 0
    %v98 = vunpack.c.l.b16 %v62
    %v99 = vunpack.c.l.b16 %v63
    %v100 = vunpack.c.l.b16 %v64
    %v101 = vunpack.c.l.b16 %v65
    %v102 = vunpack.c.l.b16 %v66
    %v103 = vunpack.c.l.b16 %v67
    %v104 = vunpack.c.l.b16 %v68
    %v105 = vunpack.c.l.b16 %v69
    %v106 = vpack.c.b16 %v99, %v98
    %v107 = vpack.c.b16 %v101, %v100
    %v108 = vpack.c.b16 %v103, %v102
    %v109 = vpack.c.b16 %v105, %v104
    %v130 = vunpack.c.l.b16 %v70
    %v131 = vunpack.c.l.b16 %v71
    %v132 = vunpack.c.l.b16 %v72
    %v133 = vunpack.c.l.b16 %v73
    %v134 = vunpack.c.l.b16 %v74
    %v135 = vunpack.c.l.b16 %v75
    %v136 = vunpack.c.l.b16 %v76
    %v137 = vunpack.c.l.b16 %v77
    %v138 = vunpack.c.l.b16 %v78
    %v139 = vunpack.c.l.b16 %v79
    %v140 = vunpack.c.l.b16 %v80
    %v141 = vunpack.c.l.b16 %v81
    %v142 = vunpack.c.l.b16 %v82
    %v143 = vunpack.c.l.b16 %v83
    %v144 = vunpack.c.l.b16 %v84
    %v145 = vunpack.c.l.b16 %v85
    %v146 = vpack.c.b16 %v131, %v130
    %v147 = vpack.c.b16 %v133, %v132
    %v148 = vpack.c.b16 %v135, %v134
    %v149 = vpack.c.b16 %v137, %v136
    %v150 = vpack.c.b16 %v139, %v138
    %v151 = vpack.c.b16 %v141, %v140
    %v152 = vpack.c.b16 %v143, %v142
    %v153 = vpack.c.b16 %v145, %v144
    %162 = vmatpush.bf16.msra.mxu0 %v153
    %163 = vmatpush.bf16.msra.mxu0 %v152
    %164 = vmatpush.bf16.msra.mxu0 %v151
    %165 = vmatpush.bf16.msra.mxu0 %v150
    %166 = vmatpush.bf16.msra.mxu0 %v149
    %167 = vmatpush.bf16.msra.mxu0 %v148
    %168 = vmatpush.bf16.msra.mxu0 %v147
    %169 = vmatpush.bf16.msra.mxu0 %v146
    %170 = vmatmul.bf16.gmra.mxu0 %v106
    %v171 = vpop.f32.mrf.mxu0
    %v172 = vadd.f32 %v88, %v171
    %v173 = vpop.f32.mrf.mxu0
    %v174 = vadd.f32 %v88, %v173
    %175 = vmatmul.bf16.gmra.mxu0 %v107
    %v176 = vpop.f32.mrf.mxu0
    %v177 = vadd.f32 %v88, %v176
    %v178 = vpop.f32.mrf.mxu0
    %v179 = vadd.f32 %v88, %v178
    %180 = vmatmul.bf16.gmra.mxu0 %v108
    %v181 = vpop.f32.mrf.mxu0
    %v182 = vadd.f32 %v88, %v181
    %v183 = vpop.f32.mrf.mxu0
    %v184 = vadd.f32 %v88, %v183
    %185 = vmatmul.bf16.gmra.mxu0 %v109
    %v186 = vpop.f32.mrf.mxu0
    %v187 = vadd.f32 %v88, %v186
    %v188 = vpop.f32.mrf.mxu0
    %v189 = vadd.f32 %v88, %v188
    %190 = vdwg.mxu0
    %v191 = vmax.f32 %v172, 0.0
    %v192 = vmax.f32 %v174, 0.0
    %v193 = vmax.f32 %v177, 0.0
    %v194 = vmax.f32 %v179, 0.0
    %v195 = vmax.f32 %v182, 0.0
    %v196 = vmax.f32 %v184, 0.0
    %v197 = vmax.f32 %v187, 0.0
    %v198 = vmax.f32 %v189, 0.0
    %v199 = vpack.c.bf16 %v192, %v191
    %v200 = vpack.c.bf16 %v194, %v193
    %v201 = vpack.c.bf16 %v196, %v195
    %v202 = vpack.c.bf16 %v198, %v197
    %s203 = scalar_lea.vmem [#allocation5], 64
    %v204 = vld [vmem:[%s203] sm:$0xf]
    %v205 = vld [vmem:[%s203 + $0x4] sm:$0xf]
    %v206 = vld [vmem:[%s203 + $0x8] sm:$0xf]
    %v207 = vld [vmem:[%s203 + $0xc] sm:$0xf]
    %v208 = vld [vmem:[%s203 + $0x10] sm:$0xf]
    %v209 = vld [vmem:[%s203 + $0x14] sm:$0xf]
    %v210 = vld [vmem:[%s203 + $0x18] sm:$0xf]
    %v211 = vld [vmem:[%s203 + $0x1c] sm:$0xf]
    %v212 = vld [vmem:[%s203 + $0x20] sm:$0xf]
    %v213 = vld [vmem:[%s203 + $0x24] sm:$0xf]
    %v214 = vld [vmem:[%s203 + $0x28] sm:$0xf]
    %v215 = vld [vmem:[%s203 + $0x2c] sm:$0xf]
    %v216 = vld [vmem:[%s203 + $0x30] sm:$0xf]
    %v217 = vld [vmem:[%s203 + $0x34] sm:$0xf]
    %v218 = vld [vmem:[%s203 + $0x38] sm:$0xf]
    %v219 = vld [vmem:[%s203 + $0x3c] sm:$0xf]
    %s220 = scalar_lea.vmem [#allocation7], 1
    %v221 = vld [vmem:[%s220] sm:$0x1]
    %v223 = vperm.slane %v221, 0
    %v241 = vunpack.c.l.b16 %v204
    %v242 = vunpack.c.l.b16 %v205
    %v243 = vunpack.c.l.b16 %v206
    %v244 = vunpack.c.l.b16 %v207
    %v245 = vunpack.c.l.b16 %v208
    %v246 = vunpack.c.l.b16 %v209
    %v247 = vunpack.c.l.b16 %v210
    %v248 = vunpack.c.l.b16 %v211
    %v249 = vunpack.c.l.b16 %v212
    %v250 = vunpack.c.l.b16 %v213
    %v251 = vunpack.c.l.b16 %v214
    %v252 = vunpack.c.l.b16 %v215
    %v253 = vunpack.c.l.b16 %v216
    %v254 = vunpack.c.l.b16 %v217
    %v255 = vunpack.c.l.b16 %v218
    %v256 = vunpack.c.l.b16 %v219
    %v257 = vpack.c.b16 %v242, %v241
    %v258 = vpack.c.b16 %v244, %v243
    %v259 = vpack.c.b16 %v246, %v245
    %v260 = vpack.c.b16 %v248, %v247
    %v261 = vpack.c.b16 %v250, %v249
    %v262 = vpack.c.b16 %v252, %v251
    %v263 = vpack.c.b16 %v254, %v253
    %v264 = vpack.c.b16 %v256, %v255
    %273 = vmatpush.bf16.msra.mxu0 %v264
    %274 = vmatpush.bf16.msra.mxu0 %v263
    %275 = vmatpush.bf16.msra.mxu0 %v262
    %276 = vmatpush.bf16.msra.mxu0 %v261
    %277 = vmatpush.bf16.msra.mxu0 %v260
    %278 = vmatpush.bf16.msra.mxu0 %v259
    %279 = vmatpush.bf16.msra.mxu0 %v258
    %280 = vmatpush.bf16.msra.mxu0 %v257
    %281 = vmatmul.bf16.gmra.mxu0 %v199
    %v282 = vpop.f32.mrf.mxu0
    %v283 = vadd.f32 %v223, %v282
    %v284 = vpop.f32.mrf.mxu0
    %v285 = vadd.f32 %v223, %v284
    %286 = vmatmul.bf16.gmra.mxu0 %v200
    %v287 = vpop.f32.mrf.mxu0
    %v288 = vadd.f32 %v223, %v287
    %v289 = vpop.f32.mrf.mxu0
    %v290 = vadd.f32 %v223, %v289
    %291 = vmatmul.bf16.gmra.mxu0 %v201
    %v292 = vpop.f32.mrf.mxu0
    %v293 = vadd.f32 %v223, %v292
    %v294 = vpop.f32.mrf.mxu0
    %v295 = vadd.f32 %v223, %v294
    %296 = vmatmul.bf16.gmra.mxu0 %v202
    %v297 = vpop.f32.mrf.mxu0
    %v298 = vadd.f32 %v223, %v297
    %v299 = vpop.f32.mrf.mxu0
    %v300 = vadd.f32 %v223, %v299
    %301 = vdwg.mxu0
    %v302 = vmax.f32 %v283, 0.0
    %v303 = vmax.f32 %v285, 0.0
    %v304 = vmax.f32 %v288, 0.0
    %v305 = vmax.f32 %v290, 0.0
    %v306 = vmax.f32 %v293, 0.0
    %v307 = vmax.f32 %v295, 0.0
    %v308 = vmax.f32 %v298, 0.0
    %v309 = vmax.f32 %v300, 0.0
    %v310 = vpack.c.bf16 %v303, %v302
    %v311 = vpack.c.bf16 %v305, %v304
    %v312 = vpack.c.bf16 %v307, %v306
    %v313 = vpack.c.bf16 %v309, %v308
    %s314 = scalar_lea.vmem [#allocation5], 128
    %v315 = vld [vmem:[%s314] sm:$0xf]
    %v316 = vld [vmem:[%s314 + $0x4] sm:$0xf]
    %v317 = vld [vmem:[%s314 + $0x8] sm:$0xf]
    %v318 = vld [vmem:[%s314 + $0xc] sm:$0xf]
    %v319 = vld [vmem:[%s314 + $0x10] sm:$0xf]
    %v320 = vld [vmem:[%s314 + $0x14] sm:$0xf]
    %v321 = vld [vmem:[%s314 + $0x18] sm:$0xf]
    %v322 = vld [vmem:[%s314 + $0x1c] sm:$0xf]
    %v323 = vld [vmem:[%s314 + $0x20] sm:$0xf]
    %v324 = vld [vmem:[%s314 + $0x24] sm:$0xf]
    %v325 = vld [vmem:[%s314 + $0x28] sm:$0xf]
    %v326 = vld [vmem:[%s314 + $0x2c] sm:$0xf]
    %v327 = vld [vmem:[%s314 + $0x30] sm:$0xf]
    %v328 = vld [vmem:[%s314 + $0x34] sm:$0xf]
    %v329 = vld [vmem:[%s314 + $0x38] sm:$0xf]
    %v330 = vld [vmem:[%s314 + $0x3c] sm:$0xf]
    %s331 = scalar_lea.vmem [#allocation7], 2
    %v332 = vld [vmem:[%s331] sm:$0x1]
    %v334 = vperm.slane %v332, 0
    %v352 = vunpack.c.l.b16 %v315
    %v353 = vunpack.c.l.b16 %v316
    %v354 = vunpack.c.l.b16 %v317
    %v355 = vunpack.c.l.b16 %v318
    %v356 = vunpack.c.l.b16 %v319
    %v357 = vunpack.c.l.b16 %v320
    %v358 = vunpack.c.l.b16 %v321
    %v359 = vunpack.c.l.b16 %v322
    %v360 = vunpack.c.l.b16 %v323
    %v361 = vunpack.c.l.b16 %v324
    %v362 = vunpack.c.l.b16 %v325
    %v363 = vunpack.c.l.b16 %v326
    %v364 = vunpack.c.l.b16 %v327
    %v365 = vunpack.c.l.b16 %v328
    %v366 = vunpack.c.l.b16 %v329
    %v367 = vunpack.c.l.b16 %v330
    %v368 = vpack.c.b16 %v353, %v352
    %v369 = vpack.c.b16 %v355, %v354
    %v370 = vpack.c.b16 %v357, %v356
    %v371 = vpack.c.b16 %v359, %v358
    %v372 = vpack.c.b16 %v361, %v360
    %v373 = vpack.c.b16 %v363, %v362
    %v374 = vpack.c.b16 %v365, %v364
    %v375 = vpack.c.b16 %v367, %v366
    %384 = vmatpush.bf16.msra.mxu0 %v375
    %385 = vmatpush.bf16.msra.mxu0 %v374
    %386 = vmatpush.bf16.msra.mxu0 %v373
    %387 = vmatpush.bf16.msra.mxu0 %v372
    %388 = vmatpush.bf16.msra.mxu0 %v371
    %389 = vmatpush.bf16.msra.mxu0 %v370
    %390 = vmatpush.bf16.msra.mxu0 %v369
    %391 = vmatpush.bf16.msra.mxu0 %v368
    %392 = vmatmul.bf16.gmra.mxu0 %v310
    %v393 = vpop.f32.mrf.mxu0
    %v394 = vadd.f32 %v334, %v393
    %v395 = vpop.f32.mrf.mxu0
    %v396 = vadd.f32 %v334, %v395
    %397 = vmatmul.bf16.gmra.mxu0 %v311
    %v398 = vpop.f32.mrf.mxu0
    %v399 = vadd.f32 %v334, %v398
    %v400 = vpop.f32.mrf.mxu0
    %v401 = vadd.f32 %v334, %v400
    %402 = vmatmul.bf16.gmra.mxu0 %v312
    %v403 = vpop.f32.mrf.mxu0
    %v404 = vadd.f32 %v334, %v403
    %v405 = vpop.f32.mrf.mxu0
    %v406 = vadd.f32 %v334, %v405
    %407 = vmatmul.bf16.gmra.mxu0 %v313
    %v408 = vpop.f32.mrf.mxu0
    %v409 = vadd.f32 %v334, %v408
    %v410 = vpop.f32.mrf.mxu0
    %v411 = vadd.f32 %v334, %v410
    %412 = vdwg.mxu0
    %413 = vst [vmem:[#allocation8] sm:$0xff] %v394
    %414 = vst [vmem:[#allocation8 + $0x8] sm:$0xff] %v396
    %415 = vst [vmem:[#allocation8 + $0x10] sm:$0xff] %v399
    %416 = vst [vmem:[#allocation8 + $0x18] sm:$0xff] %v401
    %417 = vst [vmem:[#allocation8 + $0x20] sm:$0xff] %v404
    %418 = vst [vmem:[#allocation8 + $0x28] sm:$0xff] %v406
    %419 = vst [vmem:[#allocation8 + $0x30] sm:$0xff] %v409
    %420 = vst [vmem:[#allocation8 + $0x38] sm:$0xff] %v411
    // Predicated region
    $region26: #{tpu_custom_call.1} parent=1 // pred_check
      _
    $region27: #{tpu_custom_call.1} parent=1 // pred_check_branch
      %422 = sbr.rel (0) target = $region29
    $region28: #{tpu_custom_call.1} parent=1 // pred_region
      %424 = vsyncadd [#allocation4], 0
      %s425 = sshll.u32 [#allocation8], 4
      %s426 = int_to_ptr.vmem [resolvable:$true] %s425
      %s427 = sshll.u32 %s3, 4
      %s428 = int_to_ptr.hbm [resolvable:$true] %s427
      %433 = dma.vmem_to_hbm [thread:$0]  %s426, 1024, %s428, [#allocation4], 128, 128, 8
    $region29: #{tpu_custom_call.1} parent=1 // pred_fallthru
      _
    // Predicated region
    $region30: #{tpu_custom_call.1} parent=1 // pred_check
      _
    $region31: #{tpu_custom_call.1} parent=1 // pred_check_branch
      %435 = sbr.rel (0) target = $region33
    $region32: #{tpu_custom_call.1} parent=1 // pred_region
      %437 = dma.done [#allocation4], 1024
    $region33: #{tpu_custom_call.1} parent=1 // pred_fallthru
      _
    %438 = vsyncpa [#allocation3], 1
    %439 = vsyncpa [#allocation6], 1
    %440 = vsyncpa [#allocation4], 1

</llo_original>
